<compile_context>
chip_gen: v7x
topology: tpu7x:2x2x1
jax: 0.10.0
libtpu: 0.0.40
codegen_flags: <defaults>
</compile_context>

<pallas_src>
import math
import functools

import jax
import jax.numpy as jnp
from jax import lax
from jax.experimental import pallas as pl
from jax.experimental.pallas import tpu as pltpu


# ----------------------------- helpers -----------------------------

def _round_up(x, m):
    return ((x + m - 1) // m) * m


def _layernorm(x, g, b, eps=1e-5):
    mu = jnp.mean(x, axis=-1, keepdims=True)
    var = jnp.mean((x - mu) ** 2, axis=-1, keepdims=True)
    return (x - mu) * lax.rsqrt(var + eps) * g + b


# ----------------------------- Pallas kernels -----------------------------

def _linear_kernel(x_ref, w_ref, b_ref, o_ref):
    # x_ref: (tm, Din) f32 block; w_ref: (Din, Dout) bf16; b_ref: (1, Dout) f32
    o_ref[...] = jnp.dot(x_ref[...].astype(jnp.bfloat16), w_ref[...],
                         preferred_element_type=jnp.float32) + b_ref[...]


def linear(x, w, b, tile_m=256):
    """Batched nn.Linear: batch folded into the matmul M dimension."""
    B, N, Din = x.shape
    Dout = w.shape[1]
    M = B * N
    xf = x.reshape(M, Din)
    tm = min(_round_up(M, 8), tile_m)
    Mp = _round_up(M, tm)
    if Mp != M:
        xf = jnp.pad(xf, ((0, Mp - M), (0, 0)))
    out = pl.pallas_call(
        _linear_kernel,
        out_shape=jax.ShapeDtypeStruct((Mp, Dout), jnp.float32),
        grid=(Mp // tm,),
        in_specs=[
            pl.BlockSpec((tm, Din), lambda i: (i, 0)),
            pl.BlockSpec((Din, Dout), lambda i: (0, 0)),
            pl.BlockSpec((1, Dout), lambda i: (0, 0)),
        ],
        out_specs=pl.BlockSpec((tm, Dout), lambda i: (i, 0)),
        compiler_params=pltpu.CompilerParams(dimension_semantics=("parallel",)),
    )(xf, w, b)
    return out[:M].reshape(B, N, Dout)


def _head_kernel(x_ref, g_ref, be_ref, w_ref, b_ref, o_ref):
    # nn.Sequential(LayerNorm, Linear) with batch folded into M.
    y = _layernorm(x_ref[...], g_ref[...], be_ref[...])
    o_ref[...] = jnp.dot(y.astype(jnp.bfloat16), w_ref[...],
                         preferred_element_type=jnp.float32) + b_ref[...]


def mlp_head(x, p, tile_m=256):
    B, N, D = x.shape
    Dout = p["w"].shape[1]
    M = B * N
    xf = x.reshape(M, D)
    tm = min(_round_up(M, 8), tile_m)
    Mp = _round_up(M, tm)
    if Mp != M:
        xf = jnp.pad(xf, ((0, Mp - M), (0, 0)))
    out = pl.pallas_call(
        _head_kernel,
        out_shape=jax.ShapeDtypeStruct((Mp, Dout), jnp.float32),
        grid=(Mp // tm,),
        in_specs=[
            pl.BlockSpec((tm, D), lambda i: (i, 0)),
            pl.BlockSpec((1, D), lambda i: (0, 0)),
            pl.BlockSpec((1, D), lambda i: (0, 0)),
            pl.BlockSpec((D, Dout), lambda i: (0, 0)),
            pl.BlockSpec((1, Dout), lambda i: (0, 0)),
        ],
        out_specs=pl.BlockSpec((tm, Dout), lambda i: (i, 0)),
        compiler_params=pltpu.CompilerParams(dimension_semantics=("parallel",)),
    )(xf, p["ln_g"], p["ln_b"], p["w"], p["b"])
    return out[:M].reshape(B, N, Dout)


def _stack_kernel(x_ref, mb_ref, ln1g_ref, ln1b_ref, wqkv_ref, wo_ref, bo_ref,
                  ln2g_ref, ln2b_ref, wf1_ref, bf1_ref, wf2_ref, bf2_ref,
                  o_ref, *, heads, scale, n_layers):
    # One full Transformer stack for one batch element; x stays resident in VMEM.
    x = x_ref[0]                        # (T, D) f32 residual stream
    bias = mb_ref[0]                    # (1, T) additive key-mask bias (0 keep / -1e30 drop)
    T, D = x.shape
    dh = D // heads

    for l in range(n_layers):
        # ---- Residual(PreNorm(Attention)) ----
        y = _layernorm(x, ln1g_ref[l], ln1b_ref[l])
        qkv = jnp.dot(y.astype(jnp.bfloat16), wqkv_ref[l],
                      preferred_element_type=jnp.float32)            # (T, 3D)
        q = jnp.swapaxes(qkv[:, 0 * D:1 * D].reshape(T, heads, dh), 0, 1)   # (h, T, dh)
        k = jnp.swapaxes(qkv[:, 1 * D:2 * D].reshape(T, heads, dh), 0, 1)
        v = jnp.swapaxes(qkv[:, 2 * D:3 * D].reshape(T, heads, dh), 0, 1)

        dots = jnp.einsum('hqd,hkd->hqk',
                          q.astype(jnp.bfloat16), k.astype(jnp.bfloat16),
                          preferred_element_type=jnp.float32) * scale       # (h, T, T)
        dots = dots + bias[None]                                            # mask keys
        dots = dots - jnp.max(dots, axis=-1, keepdims=True)
        e = jnp.exp(dots)
        attn = e * pl.reciprocal(jnp.sum(e, axis=-1, keepdims=True), approx=True)

        ctx = jnp.einsum('hqk,hkd->hqd',
                         attn.astype(jnp.bfloat16), v.astype(jnp.bfloat16),
                         preferred_element_type=jnp.float32)                # (h, T, dh)
        ctx = jnp.swapaxes(ctx, 0, 1).reshape(T, D)
        proj = jnp.dot(ctx.astype(jnp.bfloat16), wo_ref[l],
                       preferred_element_type=jnp.float32) + bo_ref[l]
        x = x + proj

        # ---- Residual(PreNorm(FeedForward)) ----
        y = _layernorm(x, ln2g_ref[l], ln2b_ref[l])
        h1 = jnp.dot(y.astype(jnp.bfloat16), wf1_ref[l],
                     preferred_element_type=jnp.float32) + bf1_ref[l]
        h1 = 0.5 * h1 * (1.0 + lax.erf(h1 * (1.0 / math.sqrt(2.0))))        # exact GELU
        h2 = jnp.dot(h1.astype(jnp.bfloat16), wf2_ref[l],
                     preferred_element_type=jnp.float32) + bf2_ref[l]
        x = x + h2

    o_ref[0] = x


def transformer_stack(x, mask_bias, sp, heads, scale):
    """Run a full Transformer stack (all layers fused) as one pallas_call gridded over batch."""
    B, T, D = x.shape
    L = sp["w_qkv"].shape[0]
    ff = sp["w_ff1"].shape[2]
    kern = functools.partial(_stack_kernel, heads=heads, scale=scale, n_layers=L)

    def full(shape):
        return pl.BlockSpec(shape, lambda i, _n=len(shape): (0,) * _n)

    return pl.pallas_call(
        kern,
        out_shape=jax.ShapeDtypeStruct((B, T, D), jnp.float32),
        grid=(B,),
        in_specs=[
            pl.BlockSpec((1, T, D), lambda i: (i, 0, 0)),
            pl.BlockSpec((1, 1, T), lambda i: (i, 0, 0)),
            full((L, 1, D)), full((L, 1, D)),
            full((L, D, 3 * D)),
            full((L, D, D)), full((L, 1, D)),
            full((L, 1, D)), full((L, 1, D)),
            full((L, D, ff)), full((L, 1, ff)),
            full((L, ff, D)), full((L, 1, D)),
        ],
        out_specs=pl.BlockSpec((1, T, D), lambda i: (i, 0, 0)),
        compiler_params=pltpu.CompilerParams(dimension_semantics=("parallel",)),
    )(x, mask_bias,
      sp["ln1_g"], sp["ln1_b"], sp["w_qkv"], sp["w_out"], sp["b_out"],
      sp["ln2_g"], sp["ln2_b"], sp["w_ff1"], sp["b_ff1"], sp["w_ff2"], sp["b_ff2"])


# ----------------------------- JAX glue ops -----------------------------

def image_to_tiles(image, p):
    """torch.nn.Unfold(kernel=p, stride=p) followed by 'b n c -> b c n' rearrange."""
    B, C, H, W = image.shape
    x = image.reshape(B, C, H // p, p, W // p, p)
    x = jnp.transpose(x, (0, 1, 3, 5, 2, 4))                  # b c kh kw pr pc
    x = x.reshape(B, C * p * p, (H // p) * (W // p))           # unfold output (b, C*p*p, L)
    return jnp.transpose(x, (0, 2, 1))                         # (b, L, C*p*p)


def add_positional_features(t, min_timescale=1.0, max_timescale=1.0e4):
    """Standard (allennlp-style) 1D sinusoidal positional features."""
    _, timesteps, hidden = t.shape
    ts = jnp.arange(timesteps, dtype=jnp.float32)
    num_ts = hidden // 2
    tsr = jnp.arange(num_ts, dtype=jnp.float32)
    log_inc = math.log(float(max_timescale) / float(min_timescale)) / float(num_ts - 1)
    inv = min_timescale * jnp.exp(tsr * -log_inc)
    scaled = ts[:, None] * inv[None, :]
    sin = jnp.concatenate([jnp.sin(scaled), jnp.cos(scaled)], axis=1)
    if hidden % 2 != 0:
        sin = jnp.concatenate([sin, jnp.zeros((timesteps, 1), jnp.float32)], axis=1)
    return t + sin[None]


def tiles_to_image_per_pixel(tile_output, p):
    """tiles_to_image(..., output_type='per-pixel'): 'b n (p1 p2 c) -> b c (n p1 p2)' then square."""
    B, n, dd = tile_output.shape
    c = dd // (p * p)
    img = tile_output.reshape(B, n, p, p, c)
    img = jnp.transpose(img, (0, 4, 1, 2, 3)).reshape(B, c, n * p * p)
    w = int(math.sqrt(n * p * p))
    return img.reshape(B, c, w, w)


# ----------------------------- Parameter init -----------------------------

def _std(init_scale, shape):
    if len(shape) > 2:
        in_d1, in_d2, out_d = shape
        in_d = in_d1 * in_d2
    else:
        in_d, out_d = shape
    return (2.0 / (in_d + init_scale * out_d)) ** 0.5


def init_linear(key, din, dout, init_scale=4):
    w = jax.random.normal(key, (din, dout), jnp.float32) * _std(init_scale, (din, dout))
    b = jnp.zeros((1, dout), jnp.float32)
    return w.astype(jnp.bfloat16), b          # matmul weights in bf16 (MXU-native)


def init_layer(key, dim, ff_dim, init_scale=4):
    k0, k1, k2, k3 = jax.random.split(key, 4)
    w_qkv, _ = init_linear(k0, dim, 3 * dim, init_scale)          # to_qkv (no bias)
    w_out, b_out = init_linear(k1, dim, dim, init_scale)          # to_out[0]
    w1, b1 = init_linear(k2, dim, ff_dim, init_scale)
    w2, b2 = init_linear(k3, ff_dim, dim, init_scale)
    ones = jnp.ones((1, dim), jnp.float32)
    zeros = jnp.zeros((1, dim), jnp.float32)
    return dict(ln1_g=ones, ln1_b=zeros, w_qkv=w_qkv, w_out=w_out, b_out=b_out,
                ln2_g=ones, ln2_b=zeros, w_ff1=w1, b_ff1=b1, w_ff2=w2, b_ff2=b2)


def init_stack(key, n_layers, dim, ff_dim, init_scale=4):
    layers = [init_layer(k, dim, ff_dim, init_scale)
              for k in jax.random.split(key, n_layers)]
    return {name: jnp.stack([lyr[name] for lyr in layers], axis=0) for name in layers[0]}


def init_params(key, cfg, vocab_size):
    H, p, C, ff = cfg["hidden_dim"], cfg["patch_size"], cfg["channels"], cfg["ff_dim"]
    num_patches = (cfg["image_size"] // p) ** 2
    patch_dim = C * p * p
    out_dim = p * p * cfg["n_classes"]
    ks = jax.random.split(key, 10)
    params = {
        "pos_embedding": jax.random.normal(ks[0], (1, num_patches + 1, H), jnp.float32),
        "sep_token": jax.random.normal(ks[1], (1, 1, H), jnp.float32),
        "lang_emb": jax.random.normal(ks[2], (vocab_size, cfg["lang_dim"]), jnp.float32) * 0.1,
    }
    params["patch_w"], params["patch_b"] = init_linear(ks[3], patch_dim, H)
    params["lang_w"], params["lang_b"] = init_linear(ks[4], cfg["lang_dim"], H)

    params["start_layers"] = init_stack(ks[5], cfg["n_layers_shared"], H, ff)
    params["prev_layers"] = init_stack(ks[6], cfg["n_layers_split"], H, ff)
    params["next_layers"] = init_stack(ks[7], cfg["n_layers_split"], H, ff)

    def head(k):
        w, b = init_linear(k, H, out_dim)
        return dict(ln_g=jnp.ones((1, H), jnp.float32),
                    ln_b=jnp.zeros((1, H), jnp.float32), w=w, b=b)

    params["prev_head"] = head(ks[8])
    params["next_head"] = head(ks[9])
    return params


# ----------------------------- Forward pass -----------------------------

def transformer_encoder_forward(params, cfg, image, lang_ids, lang_mask):
    p = cfg["patch_size"]
    heads = cfg["n_heads"]
    H = cfg["hidden_dim"]
    scale = H ** (-0.5)                 # matches Attention.scale = dim ** -0.5

    # _prepare_input (positional_encoding_type == 'learned')
    tiles = image_to_tiles(image, p)                                      # (B, nP, patch_dim)
    B, nP, _ = tiles.shape
    model_input = linear(tiles, params["patch_w"], params["patch_b"])     # patch_projection
    lang_emb = params["lang_emb"][lang_ids]                               # language_embedder
    lang_in = linear(lang_emb, params["lang_w"], params["lang_b"])        # language_projection
    model_input = model_input + params["pos_embedding"][:, :nP]
    lang_in = add_positional_features(lang_in)
    sep = jnp.broadcast_to(params["sep_token"], (B, 1, H))
    x = jnp.concatenate([model_input, sep, lang_in], axis=1)              # (B, T, H)

    T = x.shape[1]
    Tp = _round_up(T, 8)                                                  # sublane-aligned seq
    if Tp != T:
        x = jnp.pad(x, ((0, 0), (0, Tp - T), (0, 0)))
    long_mask = jnp.concatenate(
        [jnp.ones((B, nP + 1), jnp.float32), lang_mask.astype(jnp.float32)], axis=1)
    if Tp != T:
        long_mask = jnp.pad(long_mask, ((0, 0), (0, Tp - T)))             # pad tokens masked
    # additive key bias: 0 for keep, -1e30 for masked / padded keys
    mask_bias = ((long_mask - 1.0) * 1e30).reshape(B, 1, Tp)

    # shared + split transformers (each stack = one fused pallas_call)
    x = transformer_stack(x, mask_bias, params["start_layers"], heads, scale)
    prev = transformer_stack(x, mask_bias, params["prev_layers"], heads, scale)
    nxt = transformer_stack(x, mask_bias, params["next_layers"], heads, scale)

    prev_classes = mlp_head(prev[:, :nP, :], params["prev_head"])
    next_classes = mlp_head(nxt[:, :nP, :], params["next_head"])

    prev_pos = tiles_to_image_per_pixel(prev_classes, p)[..., None]
    next_pos = tiles_to_image_per_pixel(next_classes, p)[..., None]

    return {
        "prev_position": prev_pos,
        "next_position": next_pos,
        "next_per_patch_class": None,   # do_reconstruction=False
        "prev_per_patch_class": None,
        "next_pos_xyz": None,           # do_regression=False
        "pred_source_color": None,      # long_command=False
        "prev_attn_weights": [],        # log_weights=False
        "next_attn_weights": [],
    }


# ----------------------------- Demo -----------------------------

if __name__ == "__main__":
    cfg = dict(image_size=16, patch_size=4, channels=4, hidden_dim=32,
               ff_dim=64, n_heads=4, n_layers_shared=1, n_layers_split=1,
               n_classes=2, lang_dim=16)

    key = jax.random.PRNGKey(0)
    k_img, k_par = jax.random.split(key)
    B = 2
    image = jax.random.normal(
        k_img, (B, cfg["channels"], cfg["image_size"], cfg["image_size"]), jnp.float32)

    commands = [
        ["move", "the", "red", "block", "onto", "blue", "<PAD>", "<PAD>"],
        ["lift", "green", "cube", "<PAD>", "<PAD>", "<PAD>", "<PAD>", "<PAD>"],
    ]
    vocab = {}
    for seq in commands:
        for w in seq:
            if w not in vocab:
                vocab[w] = len(vocab)
    lang_ids = jnp.array([[vocab[w] for w in seq] for seq in commands], jnp.int32)
    lang_mask = jnp.array([[0.0 if w == "<PAD>" else 1.0 for w in seq] for seq in commands],
                          jnp.float32)   # get_lang_mask

    params = init_params(k_par, cfg, vocab_size=len(vocab))
    out = transformer_encoder_forward(params, cfg, image, lang_ids, lang_mask)

    jax.block_until_ready(out["prev_position"])
    jax.block_until_ready(out["next_position"])
    assert out["prev_position"].shape == (B, cfg["n_classes"], cfg["image_size"], cfg["image_size"], 1)
    assert out["next_position"].shape == (B, cfg["n_classes"], cfg["image_size"], cfg["image_size"], 1)
    assert jnp.all(jnp.isfinite(out["prev_position"]))
    assert jnp.all(jnp.isfinite(out["next_position"]))
    print("KERNEL_OK")
</pallas_src>

<mosaic_0001>
module attributes {stable_mosaic.version = 11 : i64} {
  func.func @_linear_kernel(%arg0: i32, %arg1: memref<32x64xf32, #tpu.memory_space<vmem>>, %arg2: memref<64x32xbf16, #tpu.memory_space<vmem>>, %arg3: memref<1x32xf32, #tpu.memory_space<vmem>>, %arg4: memref<32x32xf32, #tpu.memory_space<vmem>>) attributes {dimension_semantics = [#tpu.dimension_semantics<parallel>], iteration_bounds = array<i64: 1>, scalar_prefetch = 0 : i64, scratch_operands = 0 : i64, tpu.core_type = #tpu.core_type<tc>, window_params = [{transform_indices = @transform_0, window_bounds = array<i64: 32, 64>}, {pipeline_mode = #tpu.pipeline_mode<synchronous>, transform_indices = @transform_1, window_bounds = array<i64: 64, 32>}, {pipeline_mode = #tpu.pipeline_mode<synchronous>, transform_indices = @transform_2, window_bounds = array<i64: 1, 32>}, {transform_indices = @transform_3, window_bounds = array<i64: 32, 32>}]} {
    %c0 = arith.constant 0 : index
    %c0_0 = arith.constant 0 : index
    %0 = vector.load %arg1[%c0, %c0_0] : memref<32x64xf32, #tpu.memory_space<vmem>>, vector<32x64xf32>
    %1 = arith.truncf %0 : vector<32x64xf32> to vector<32x64xbf16>
    %c0_1 = arith.constant 0 : index
    %c0_2 = arith.constant 0 : index
    %2 = vector.load %arg2[%c0_1, %c0_2] : memref<64x32xbf16, #tpu.memory_space<vmem>>, vector<64x32xbf16>
    %cst = arith.constant dense<0.000000e+00> : vector<32x32xf32>
    %3 = tpu.matmul %1, %2, %cst {dimension_numbers = #tpu.dot_dimension_numbers<[1], [0], [0], [1], [0, 0, 1, 1], [], []>} : vector<32x64xbf16>, vector<64x32xbf16>, vector<32x32xf32> -> vector<32x32xf32>
    %c0_3 = arith.constant 0 : index
    %c0_4 = arith.constant 0 : index
    %4 = vector.load %arg3[%c0_3, %c0_4] : memref<1x32xf32, #tpu.memory_space<vmem>>, vector<1x32xf32>
    %5 = vector.broadcast %4 : vector<1x32xf32> to vector<32x32xf32>
    %6 = arith.addf %3, %5 : vector<32x32xf32>
    %c0_5 = arith.constant 0 : index
    %c0_6 = arith.constant 0 : index
    %7 = vector.load %arg4[%c0_5, %c0_6] : memref<32x32xf32, #tpu.memory_space<vmem>>, vector<32x32xf32>
    tpu.vector_store %arg4[%c0_5, %c0_6], %6 {strides = array<i32>} : memref<32x32xf32, #tpu.memory_space<vmem>>, vector<32x32xf32>,
    return
  }
  func.func @transform_0(%arg0: i32) -> (i32, i32) {
    %c0_i32 = arith.constant 0 : i32
    %c0_i32_0 = arith.constant 0 : i32
    return %arg0, %c0_i32 : i32, i32
  }
  func.func @transform_1(%arg0: i32) -> (i32, i32) {
    %c0_i32 = arith.constant 0 : i32
    %c0_i32_0 = arith.constant 0 : i32
    %c0_i32_1 = arith.constant 0 : i32
    return %c0_i32, %c0_i32_0 : i32, i32
  }
  func.func @transform_2(%arg0: i32) -> (i32, i32) {
    %c0_i32 = arith.constant 0 : i32
    %c0_i32_0 = arith.constant 0 : i32
    %c0_i32_1 = arith.constant 0 : i32
    return %c0_i32, %c0_i32_0 : i32, i32
  }
  func.func @transform_3(%arg0: i32) -> (i32, i32) {
    %c0_i32 = arith.constant 0 : i32
    %c0_i32_0 = arith.constant 0 : i32
    return %arg0, %c0_i32 : i32, i32
  }
}

</mosaic_0001>

<llo_original>
// kernel: tpu_custom_call.1
$region0: #{tpu_custom_call.1}
  #allocation0 [shape = 'u32[]', space=smem, size = 0x4, offset = 0x4, fixed_abs, tag = 'smem constant byte address 0x4 - core index']
  #allocation1 [shape = 'u32[144,128]{1,0:T(1,128)}', space=vmem, size = 0x12000, scoped, tag = 'internal scratch']
  %s0 = inlined_call_operand.vmem [shape: f32[32,64], index: 0, kind: input, shape index: {}]
  %s1 = inlined_call_operand.vmem [shape: bf16[64,32], index: 1, kind: input, shape index: {}]
  %s2 = inlined_call_operand.vmem [shape: f32[1,32], index: 2, kind: input, shape index: {}]
  %s3 = inlined_call_operand.hbm [shape: f32[32,32], index: 3, kind: output, shape index: {}]
  %s4 = sld [smem:[#allocation0]]
  $region22: #{tpu_custom_call.1} parent=0
    _
  %s6 = ssub.s32 1, %s4
  %s7 = scalar_select 0, %s6, %s4
  $region1: #{tpu_custom_call.1} parent=0
    #allocation2 [shape = 'u8[16384]{0}', space=vmem, size = 0x4000, scoped, tag = 'output window, operand 0, single buffered']
    #allocation3 [shape = 's32[1]{0}', space=sflag, size = 0x4, scoped, tag = 'scoped memory for tpu_custom_call.1']
    %8 = vsyncpa [#allocation3], 0
    // Predicated region
    $region2: #{tpu_custom_call.1} parent=1 // pred_check
      _
    $region3: #{tpu_custom_call.1} parent=1 // pred_check_branch
      %10 = sbr.rel (0) target = $region5
    $region4: #{tpu_custom_call.1} parent=1 // pred_region
      _
    $region5: #{tpu_custom_call.1} parent=1 // pred_fallthru
      _
    // Predicated region
    $region6: #{tpu_custom_call.1} parent=1 // pred_check
      _
    $region7: #{tpu_custom_call.1} parent=1 // pred_check_branch
      %12 = sbr.rel (0) target = $region9
    $region8: #{tpu_custom_call.1} parent=1 // pred_region
      _
    $region9: #{tpu_custom_call.1} parent=1 // pred_fallthru
      _
    // Predicated region
    $region10: #{tpu_custom_call.1} parent=1 // pred_check
      _
    $region11: #{tpu_custom_call.1} parent=1 // pred_check_branch
      %14 = sbr.rel (0) target = $region13
    $region12: #{tpu_custom_call.1} parent=1 // pred_region
      _
    $region13: #{tpu_custom_call.1} parent=1 // pred_fallthru
      _
    %v16 = vld [vmem:[%s0] sm:$0xff]
    %v17 = vld [vmem:[%s0 + $0x8] sm:$0xff]
    %v18 = vld [vmem:[%s0 + $0x10] sm:$0xff]
    %v19 = vld [vmem:[%s0 + $0x18] sm:$0xff]
    %v20 = vpack.c.bf16 %v17, %v16
    %v21 = vpack.c.bf16 %v19, %v18
    %v22 = vld [vmem:[%s1] sm:$0xf]
    %v23 = vld [vmem:[%s1 + $0x4] sm:$0xf]
    %v24 = vld [vmem:[%s1 + $0x8] sm:$0xf]
    %v25 = vld [vmem:[%s1 + $0xc] sm:$0xf]
    %v26 = vld [vmem:[%s1 + $0x10] sm:$0xf]
    %v27 = vld [vmem:[%s1 + $0x14] sm:$0xf]
    %v28 = vld [vmem:[%s1 + $0x18] sm:$0xf]
    %v29 = vld [vmem:[%s1 + $0x1c] sm:$0xf]
    %v30 = vld [vmem:[%s2] sm:$0x1]
    %v32 = vlaneseq
    %v33 = vshrl.u32 %v32, 7
    %v34 = vsub.s32 0, %v33
    %v35 = vrot.slane %v30, %v34
    %v45 = vunpack.c.l.b16 %v22
    %v46 = vunpack.c.l.b16 %v23
    %v47 = vunpack.c.l.b16 %v24
    %v48 = vunpack.c.l.b16 %v25
    %v49 = vunpack.c.l.b16 %v26
    %v50 = vunpack.c.l.b16 %v27
    %v51 = vunpack.c.l.b16 %v28
    %v52 = vunpack.c.l.b16 %v29
    %v53 = vpack.c.b16 %v46, %v45
    %v54 = vpack.c.b16 %v48, %v47
    %v55 = vpack.c.b16 %v50, %v49
    %v56 = vpack.c.b16 %v52, %v51
    %vm61 = vcmask 523264
    %v63 = vsel %vm61, %v20, 0
    %v66 = vsel %vm61, %v21, 0
    %68 = vmatprep.subr.bf16.mxu0 0
    %69 = vmatpush1.bf16.msra.mxu0 %v53
    %70 = vmatprep.subr.bf16.mxu0 0
    %71 = vmatpush1.bf16.msra.mxu0 %v54
    %72 = vmatprep.subr.bf16.mxu0 0
    %73 = vmatpush1.bf16.msra.mxu0 %v55
    %74 = vmatprep.subr.bf16.mxu0 0
    %75 = vmatpush1.bf16.msra.mxu0 %v56
    %76 = vmatprep.subr.bf16.mxu0 0
    %77 = vmatpush1.bf16.msra.mxu0 0
    %78 = vmatprep.subr.bf16.mxu0 0
    %79 = vmatpush1.bf16.msra.mxu0 0
    %80 = vmatprep.subr.bf16.mxu0 0
    %81 = vmatpush1.bf16.msra.mxu0 0
    %82 = vmatprep.subr.bf16.mxu0 0
    %83 = vmatpush1.bf16.msra.mxu0 0
    %84 = vmatprep.subr.bf16.mxu0 0
    %85 = vmatpush1.bf16.msra.mxu0 0
    %86 = vmatprep.subr.bf16.mxu0 0
    %87 = vmatpush1.bf16.msra.mxu0 0
    %88 = vmatprep.subr.bf16.mxu0 0
    %89 = vmatpush1.bf16.msra.mxu0 0
    %90 = vmatprep.subr.bf16.mxu0 0
    %91 = vmatpush1.bf16.msra.mxu0 0
    %92 = vmatprep.subr.bf16.mxu0 0
    %93 = vmatpush1.bf16.msra.mxu0 0
    %94 = vmatprep.subr.bf16.mxu0 0
    %95 = vmatpush1.bf16.msra.mxu0 0
    %96 = vmatprep.subr.bf16.mxu0 0
    %97 = vmatpush1.bf16.msra.mxu0 0
    %98 = vmatprep.subr.bf16.mxu0 0
    %99 = vmatpush1.bf16.msra.mxu0 0
    %100 = vmatprep.mubr.bf16.mxu0 0
    %101 = vmatmul.mubr.bf16.gmra.mrb[0].mxu0 %v63
    %v102 = vpop.f32.mrb[0].mxu0
    %v103 = vadd.f32 %v35, %v102
    %v104 = vpop.f32.mrb[0].mxu0
    %v105 = vpop.f32.mrb[0].mxu0
    %v106 = vadd.f32 %v35, %v105
    %v107 = vpop.f32.mrb[0].mxu0
    %108 = vmatprep.mubr.bf16.mxu0 0
    %109 = vmatmul.mubr.bf16.gmra.mrb[0].mxu0 %v66
    %v110 = vpop.f32.mrb[0].mxu0
    %v111 = vadd.f32 %v35, %v110
    %v112 = vpop.f32.mrb[0].mxu0
    %v113 = vpop.f32.mrb[0].mxu0
    %v114 = vadd.f32 %v35, %v113
    %v115 = vpop.f32.mrb[0].mxu0
    %116 = vdwg.mxu0
    %vm117 = vcmask 261120
    %118 = vst.msk [vmem:[#allocation2] sm:$0xff] %vm117, %v103
    %119 = vst.msk [vmem:[#allocation2 + $0x8] sm:$0xff] %vm117, %v106
    %120 = vst.msk [vmem:[#allocation2 + $0x10] sm:$0xff] %vm117, %v111
    %121 = vst.msk [vmem:[#allocation2 + $0x18] sm:$0xff] %vm117, %v114
    // Predicated region
    $region14: #{tpu_custom_call.1} parent=1 // pred_check
      _
    $region15: #{tpu_custom_call.1} parent=1 // pred_check_branch
      %123 = sbr.rel (0) target = $region17
    $region16: #{tpu_custom_call.1} parent=1 // pred_region
      %s125 = ssub.s32 512, 512
      %126 = vsyncadd [#allocation3], %s125
      %s127 = sshll.u32 [#allocation2], 4
      %s128 = int_to_ptr.vmem [resolvable:$true] %s127
      %133 = dma.vmem_to_hbm [thread:$0]  %s128, 512, %s3, [#allocation3], 128, 128, 8
    $region17: #{tpu_custom_call.1} parent=1 // pred_fallthru
      _
    // Predicated region
    $region18: #{tpu_custom_call.1} parent=1 // pred_check
      _
    $region19: #{tpu_custom_call.1} parent=1 // pred_check_branch
      %135 = sbr.rel (0) target = $region21
    $region20: #{tpu_custom_call.1} parent=1 // pred_region
      %136 = dma.done [#allocation3], 512
    $region21: #{tpu_custom_call.1} parent=1 // pred_fallthru
      _
    %137 = vsyncpa [#allocation3], 1

</llo_original>
